<compile_context>
chip_gen: v7x
topology: tpu7x:2x2x1
jax: 0.10.0
libtpu: 0.0.40
codegen_flags: <defaults>
</compile_context>

<pallas_src>
import functools

import jax
import jax.numpy as jnp
from jax.experimental import pallas as pl
from jax.experimental.pallas import tpu as pltpu


def _round_up(x, m):
    return ((x + m - 1) // m) * m


def _pick_tile(total, preferred, granule):
    """Largest multiple of `granule` <= preferred that divides `total`.

    Falls back to min(preferred, round_up(total, granule)); the caller pads in
    that case.
    """
    preferred = min(preferred, _round_up(total, granule))
    t = (preferred // granule) * granule
    while t >= granule:
        if total % t == 0:
            return t
        t -= granule
    return preferred


def _epilogue(acc_f32, b_ref, res_ref, gamma_ref, beta_ref, out_ref, eps):
    """bias + residual + LayerNorm + affine, fp32 math, single store."""
    x = (acc_f32
         + b_ref[...].astype(jnp.float32)
         + res_ref[...].astype(jnp.float32))
    mean = jnp.mean(x, axis=-1, keepdims=True)
    centered = x - mean
    var = jnp.mean(centered * centered, axis=-1, keepdims=True)
    y = centered * jax.lax.rsqrt(var + eps)
    y = (y * gamma_ref[...].astype(jnp.float32)
         + beta_ref[...].astype(jnp.float32))
    out_ref[...] = y.astype(out_ref.dtype)


def _kernel_multi_k(hs_ref, w_ref, b_ref, res_ref, gamma_ref, beta_ref,
                    out_ref, acc_ref, *, eps):
    """One (row_tile, K_tile) step of y = LN(hs @ W + b + residual)."""
    k = pl.program_id(1)

    @pl.when(k == 0)
    def _():
        acc_ref[...] = jnp.zeros_like(acc_ref)

    # MXU matmul, fp32 accumulation.
    acc_ref[...] += jnp.dot(hs_ref[...], w_ref[...],
                            preferred_element_type=jnp.float32)

    @pl.when(k == pl.num_programs(1) - 1)
    def _():
        _epilogue(acc_ref[...], b_ref, res_ref, gamma_ref, beta_ref, out_ref,
                  eps)


def _kernel_single_k(hs_ref, w_ref, b_ref, res_ref, gamma_ref, beta_ref,
                     out_ref, *, eps):
    """Whole K axis fits in one tile: no accumulator scratch needed."""
    acc = jnp.dot(hs_ref[...], w_ref[...], preferred_element_type=jnp.float32)
    _epilogue(acc, b_ref, res_ref, gamma_ref, beta_ref, out_ref, eps)


def blip2_qformer_output_forward(hidden_states, input_tensor, weight, bias,
                                 ln_weight, ln_bias, *, eps,
                                 block_rows=256, block_k=512):
    """Fused Linear(I->H) + residual + LayerNorm.

    hidden_states: (B, S, I)     input_tensor: (B, S, H)
    weight: (I, H)  (already transposed vs. PyTorch's (H, I) layout)
    bias, ln_weight, ln_bias: (H,)
    Returns (B, S, H) in input_tensor's dtype (matches nn.LayerNorm output).
    """
    B, S, K = hidden_states.shape
    H = input_tensor.shape[-1]
    out_dtype = input_tensor.dtype
    R = B * S

    hs2 = hidden_states.reshape(R, K)
    res2 = input_tensor.reshape(R, H)

    # Row (sublane) tile: large to amortize ~0.35us per-grid-step overhead;
    # prefer an exact divisor of R so no HBM padding copy is needed.
    tm = _pick_tile(R, block_rows, 8)
    r_pad = _round_up(R, tm)
    # Reduction (K) tile: multiple of 128 (lane axis of the activations tile);
    # prefer an exact divisor of K.
    tk = _pick_tile(K, block_k, 128)
    k_pad = _round_up(K, tk)

    if r_pad != R or k_pad != K:
        hs2 = jnp.pad(hs2, ((0, r_pad - R), (0, k_pad - K)))
    if r_pad != R:
        res2 = jnp.pad(res2, ((0, r_pad - R), (0, 0)))
    if k_pad != K:
        # Zero-padded K columns contribute nothing to the matmul.
        weight = jnp.pad(weight, ((0, k_pad - K), (0, 0)))

    bias2 = bias.reshape(1, H)
    gamma2 = ln_weight.reshape(1, H)
    beta2 = ln_bias.reshape(1, H)

    n_row_tiles = r_pad // tm
    n_k_tiles = k_pad // tk

    if n_k_tiles == 1:
        # Fast path: single K tile, no accumulator scratch, 1-D grid.
        grid_spec = pltpu.PrefetchScalarGridSpec(
            num_scalar_prefetch=0,
            grid=(n_row_tiles,),
            in_specs=[
                pl.BlockSpec((tm, tk), lambda i: (i, 0)),   # activations tile
                pl.BlockSpec((tk, H), lambda i: (0, 0)),    # dense weight
                pl.BlockSpec((1, H), lambda i: (0, 0)),     # dense bias
                pl.BlockSpec((tm, H), lambda i: (i, 0)),    # residual tile
                pl.BlockSpec((1, H), lambda i: (0, 0)),     # LN gamma
                pl.BlockSpec((1, H), lambda i: (0, 0)),     # LN beta
            ],
            out_specs=pl.BlockSpec((tm, H), lambda i: (i, 0)),
        )
        kernel = functools.partial(_kernel_single_k, eps=eps)
        dim_sem = ("parallel",)
    else:
        grid_spec = pltpu.PrefetchScalarGridSpec(
            num_scalar_prefetch=0,
            grid=(n_row_tiles, n_k_tiles),
            in_specs=[
                pl.BlockSpec((tm, tk), lambda i, k: (i, k)),  # activations
                pl.BlockSpec((tk, H), lambda i, k: (k, 0)),   # dense weight
                pl.BlockSpec((1, H), lambda i, k: (0, 0)),    # dense bias
                pl.BlockSpec((tm, H), lambda i, k: (i, 0)),   # residual
                pl.BlockSpec((1, H), lambda i, k: (0, 0)),    # LN gamma
                pl.BlockSpec((1, H), lambda i, k: (0, 0)),    # LN beta
            ],
            out_specs=pl.BlockSpec((tm, H), lambda i, k: (i, 0)),
            scratch_shapes=[pltpu.VMEM((tm, H), jnp.float32)],
        )
        kernel = functools.partial(_kernel_multi_k, eps=eps)
        dim_sem = ("parallel", "arbitrary")

    out = pl.pallas_call(
        kernel,
        out_shape=jax.ShapeDtypeStruct((r_pad, H), out_dtype),
        grid_spec=grid_spec,
        compiler_params=pltpu.CompilerParams(dimension_semantics=dim_sem),
    )(hs2, weight, bias2, res2, gamma2, beta2)

    if r_pad != R:
        out = out[:R]
    return out.reshape(B, S, H)


class Blip2QFormerOutputPallas:
    """JAX/Pallas re-implementation of Blip2QFormerOutput (inference)."""

    def __init__(self, intermediate_size, hidden_size, layer_norm_eps, key,
                 dtype=jnp.float32):
        k_w, k_b = jax.random.split(key)
        # nn.Linear default init: U(-1/sqrt(fan_in), 1/sqrt(fan_in)).
        bound = 1.0 / (intermediate_size ** 0.5)
        # Stored transposed, (in_features, out_features), for the kernel matmul.
        self.weight = jax.random.uniform(
            k_w, (intermediate_size, hidden_size), minval=-bound, maxval=bound,
            dtype=dtype)
        self.bias = jax.random.uniform(
            k_b, (hidden_size,), minval=-bound, maxval=bound, dtype=dtype)
        # LayerNorm affine defaults (weight=1, bias=0).
        self.ln_weight = jnp.ones((hidden_size,), dtype=dtype)
        self.ln_bias = jnp.zeros((hidden_size,), dtype=dtype)
        self.eps = layer_norm_eps
        self.block_rows = 256
        self.block_k = 512

    def __call__(self, hidden_states, input_tensor):
        # self.dropout is identity at inference time.
        return blip2_qformer_output_forward(
            hidden_states, input_tensor, self.weight, self.bias,
            self.ln_weight, self.ln_bias, eps=self.eps,
            block_rows=self.block_rows, block_k=self.block_k)


def _reference(module, hidden_states, input_tensor):
    """Pure-JAX reference of the same forward for correctness checking."""
    h = jnp.dot(hidden_states.astype(jnp.float32),
                module.weight.astype(jnp.float32),
                precision=jax.lax.Precision.HIGHEST) + module.bias.astype(
                    jnp.float32)
    x = h + input_tensor.astype(jnp.float32)
    mean = jnp.mean(x, axis=-1, keepdims=True)
    var = jnp.mean((x - mean) ** 2, axis=-1, keepdims=True)
    y = (x - mean) * jax.lax.rsqrt(var + module.eps)
    return y * module.ln_weight.astype(jnp.float32) + module.ln_bias.astype(
        jnp.float32)


def _run_case(key, hidden_size, intermediate_size, batch, seq, block_k):
    k_params, k_hs, k_res, k_g, k_bta = jax.random.split(key, 5)
    module = Blip2QFormerOutputPallas(
        intermediate_size=intermediate_size,
        hidden_size=hidden_size,
        layer_norm_eps=1e-12,
        key=k_params,
    )
    module.block_k = block_k
    # Randomize the LayerNorm affine so the test exercises that path too.
    module.ln_weight = jax.random.uniform(
        k_g, (hidden_size,), minval=0.5, maxval=1.5, dtype=jnp.float32)
    module.ln_bias = 0.1 * jax.random.normal(
        k_bta, (hidden_size,), dtype=jnp.float32)

    hidden_states = jax.random.normal(
        k_hs, (batch, seq, intermediate_size), dtype=jnp.float32)
    input_tensor = jax.random.normal(
        k_res, (batch, seq, hidden_size), dtype=jnp.float32)

    out = jax.block_until_ready(module(hidden_states, input_tensor))
    ref = _reference(module, hidden_states, input_tensor)
    assert out.shape == (batch, seq, hidden_size)
    # Tolerance covers possible MXU multi-pass f32 accumulation differences vs.
    # the XLA HIGHEST-precision reference (outputs are O(1) after LayerNorm).
    assert jnp.allclose(out.astype(jnp.float32), ref, atol=1e-2, rtol=1e-2), \
        "mismatch vs reference"


if __name__ == "__main__":
    key = jax.random.PRNGKey(0)
    k1, k2 = jax.random.split(key)

    # Case 1: single-K fast path (intermediate = 4 * hidden, like the module).
    _run_case(k1, hidden_size=32, intermediate_size=128, batch=2, seq=8,
              block_k=512)
    # Case 2: multi-K accumulator path (force 2 reduction steps).
    _run_case(k2, hidden_size=32, intermediate_size=256, batch=2, seq=8,
              block_k=128)

    print("KERNEL_OK")
</pallas_src>

<mosaic_0001>
module attributes {stable_mosaic.version = 11 : i64} {
  func.func @_kernel_single_k(%arg0: i32, %arg1: memref<16x128xf32, #tpu.memory_space<vmem>>, %arg2: memref<128x32xf32, #tpu.memory_space<vmem>>, %arg3: memref<1x32xf32, #tpu.memory_space<vmem>>, %arg4: memref<16x32xf32, #tpu.memory_space<vmem>>, %arg5: memref<1x32xf32, #tpu.memory_space<vmem>>, %arg6: memref<1x32xf32, #tpu.memory_space<vmem>>, %arg7: memref<16x32xf32, #tpu.memory_space<vmem>>) attributes {dimension_semantics = [#tpu.dimension_semantics<parallel>], iteration_bounds = array<i64: 1>, scalar_prefetch = 0 : i64, scratch_operands = 0 : i64, tpu.core_type = #tpu.core_type<tc>, window_params = [{transform_indices = @transform_0, window_bounds = array<i64: 16, 128>}, {pipeline_mode = #tpu.pipeline_mode<synchronous>, transform_indices = @transform_1, window_bounds = array<i64: 128, 32>}, {pipeline_mode = #tpu.pipeline_mode<synchronous>, transform_indices = @transform_2, window_bounds = array<i64: 1, 32>}, {transform_indices = @transform_3, window_bounds = array<i64: 16, 32>}, {pipeline_mode = #tpu.pipeline_mode<synchronous>, transform_indices = @transform_4, window_bounds = array<i64: 1, 32>}, {pipeline_mode = #tpu.pipeline_mode<synchronous>, transform_indices = @transform_5, window_bounds = array<i64: 1, 32>}, {transform_indices = @transform_6, window_bounds = array<i64: 16, 32>}]} {
    %c0 = arith.constant 0 : index
    %c0_0 = arith.constant 0 : index
    %0 = vector.load %arg1[%c0, %c0_0] : memref<16x128xf32, #tpu.memory_space<vmem>>, vector<16x128xf32>
    %c0_1 = arith.constant 0 : index
    %c0_2 = arith.constant 0 : index
    %1 = vector.load %arg2[%c0_1, %c0_2] : memref<128x32xf32, #tpu.memory_space<vmem>>, vector<128x32xf32>
    %cst = arith.constant dense<0.000000e+00> : vector<16x32xf32>
    %2 = tpu.matmul %0, %1, %cst {dimension_numbers = #tpu.dot_dimension_numbers<[1], [0], [0], [1], [0, 0, 1, 1], [], []>} : vector<16x128xf32>, vector<128x32xf32>, vector<16x32xf32> -> vector<16x32xf32>
    %c0_3 = arith.constant 0 : index
    %c0_4 = arith.constant 0 : index
    %3 = vector.load %arg3[%c0_3, %c0_4] : memref<1x32xf32, #tpu.memory_space<vmem>>, vector<1x32xf32>
    %4 = vector.broadcast %3 : vector<1x32xf32> to vector<16x32xf32>
    %5 = arith.addf %2, %4 : vector<16x32xf32>
    %c0_5 = arith.constant 0 : index
    %c0_6 = arith.constant 0 : index
    %6 = vector.load %arg4[%c0_5, %c0_6] : memref<16x32xf32, #tpu.memory_space<vmem>>, vector<16x32xf32>
    %7 = arith.addf %5, %6 : vector<16x32xf32>
    %cst_7 = arith.constant dense<0.000000e+00> : vector<16xf32>
    %8 = vector.multi_reduction <add>, %7, %cst_7 [1] : vector<16x32xf32> to vector<16xf32>
    %9 = vector.shape_cast %8 : vector<16xf32> to vector<16x1xf32>
    %cst_8 = arith.constant 3.200000e+01 : f32
    %10 = vector.broadcast %cst_8 : f32 to vector<16x1xf32>
    %11 = arith.divf %9, %10 : vector<16x1xf32>
    %12 = vector.broadcast %11 : vector<16x1xf32> to vector<16x32xf32>
    %13 = arith.subf %7, %12 : vector<16x32xf32>
    %14 = arith.mulf %13, %13 : vector<16x32xf32>
    %cst_9 = arith.constant dense<0.000000e+00> : vector<16xf32>
    %15 = vector.multi_reduction <add>, %14, %cst_9 [1] : vector<16x32xf32> to vector<16xf32>
    %16 = vector.shape_cast %15 : vector<16xf32> to vector<16x1xf32>
    %cst_10 = arith.constant 3.200000e+01 : f32
    %17 = vector.broadcast %cst_10 : f32 to vector<16x1xf32>
    %18 = arith.divf %16, %17 : vector<16x1xf32>
    %cst_11 = arith.constant 9.99999996E-13 : f32
    %19 = vector.broadcast %cst_11 : f32 to vector<16x1xf32>
    %20 = arith.addf %18, %19 : vector<16x1xf32>
    %21 = math.rsqrt %20 : vector<16x1xf32>
    %22 = vector.broadcast %21 : vector<16x1xf32> to vector<16x32xf32>
    %23 = arith.mulf %13, %22 : vector<16x32xf32>
    %c0_12 = arith.constant 0 : index
    %c0_13 = arith.constant 0 : index
    %24 = vector.load %arg5[%c0_12, %c0_13] : memref<1x32xf32, #tpu.memory_space<vmem>>, vector<1x32xf32>
    %25 = vector.broadcast %24 : vector<1x32xf32> to vector<16x32xf32>
    %26 = arith.mulf %23, %25 : vector<16x32xf32>
    %c0_14 = arith.constant 0 : index
    %c0_15 = arith.constant 0 : index
    %27 = vector.load %arg6[%c0_14, %c0_15] : memref<1x32xf32, #tpu.memory_space<vmem>>, vector<1x32xf32>
    %28 = vector.broadcast %27 : vector<1x32xf32> to vector<16x32xf32>
    %29 = arith.addf %26, %28 : vector<16x32xf32>
    %c0_16 = arith.constant 0 : index
    %c0_17 = arith.constant 0 : index
    %30 = vector.load %arg7[%c0_16, %c0_17] : memref<16x32xf32, #tpu.memory_space<vmem>>, vector<16x32xf32>
    tpu.vector_store %arg7[%c0_16, %c0_17], %29 {strides = array<i32>} : memref<16x32xf32, #tpu.memory_space<vmem>>, vector<16x32xf32>,
    return
  }
  func.func @transform_0(%arg0: i32) -> (i32, i32) {
    %c0_i32 = arith.constant 0 : i32
    %c0_i32_0 = arith.constant 0 : i32
    return %arg0, %c0_i32 : i32, i32
  }
  func.func @transform_1(%arg0: i32) -> (i32, i32) {
    %c0_i32 = arith.constant 0 : i32
    %c0_i32_0 = arith.constant 0 : i32
    %c0_i32_1 = arith.constant 0 : i32
    return %c0_i32, %c0_i32_0 : i32, i32
  }
  func.func @transform_2(%arg0: i32) -> (i32, i32) {
    %c0_i32 = arith.constant 0 : i32
    %c0_i32_0 = arith.constant 0 : i32
    %c0_i32_1 = arith.constant 0 : i32
    return %c0_i32, %c0_i32_0 : i32, i32
  }
  func.func @transform_3(%arg0: i32) -> (i32, i32) {
    %c0_i32 = arith.constant 0 : i32
    %c0_i32_0 = arith.constant 0 : i32
    return %arg0, %c0_i32 : i32, i32
  }
  func.func @transform_4(%arg0: i32) -> (i32, i32) {
    %c0_i32 = arith.constant 0 : i32
    %c0_i32_0 = arith.constant 0 : i32
    %c0_i32_1 = arith.constant 0 : i32
    return %c0_i32, %c0_i32_0 : i32, i32
  }
  func.func @transform_5(%arg0: i32) -> (i32, i32) {
    %c0_i32 = arith.constant 0 : i32
    %c0_i32_0 = arith.constant 0 : i32
    %c0_i32_1 = arith.constant 0 : i32
    return %c0_i32, %c0_i32_0 : i32, i32
  }
  func.func @transform_6(%arg0: i32) -> (i32, i32) {
    %c0_i32 = arith.constant 0 : i32
    %c0_i32_0 = arith.constant 0 : i32
    return %arg0, %c0_i32 : i32, i32
  }
}

</mosaic_0001>

<llo_original>
// kernel: tpu_custom_call.1
$region0: #{tpu_custom_call.1}
  #allocation0 [shape = 'u32[]', space=smem, size = 0x4, offset = 0x4, fixed_abs, tag = 'smem constant byte address 0x4 - core index']
  #allocation1 [shape = 'u32[144,128]{1,0:T(1,128)}', space=vmem, size = 0x12000, scoped, tag = 'internal scratch']
  %s0 = inlined_call_operand.vmem [shape: f32[16,128], index: 0, kind: input, shape index: {}]
  %s1 = inlined_call_operand.vmem [shape: f32[128,32], index: 1, kind: input, shape index: {}]
  %s2 = inlined_call_operand.vmem [shape: f32[1,32], index: 2, kind: input, shape index: {}]
  %s3 = inlined_call_operand.vmem [shape: f32[16,32], index: 3, kind: input, shape index: {}]
  %s4 = inlined_call_operand.vmem [shape: f32[1,32], index: 4, kind: input, shape index: {}]
  %s5 = inlined_call_operand.vmem [shape: f32[1,32], index: 5, kind: input, shape index: {}]
  %s6 = inlined_call_operand.hbm [shape: f32[16,32], index: 6, kind: output, shape index: {}]
  %s7 = sld [smem:[#allocation0]]
  $region34: #{tpu_custom_call.1} parent=0
    _
  %s9 = ssub.s32 1, %s7
  %s10 = scalar_select 0, %s9, %s7
  $region1: #{tpu_custom_call.1} parent=0
    #allocation2 [shape = 'u8[8192]{0}', space=vmem, size = 0x2000, scoped, tag = 'output window, operand 0, single buffered']
    #allocation3 [shape = 's32[1]{0}', space=sflag, size = 0x4, scoped, tag = 'scoped memory for tpu_custom_call.1']
    %11 = vsyncpa [#allocation3], 0
    // Predicated region
    $region2: #{tpu_custom_call.1} parent=1 // pred_check
      _
    $region3: #{tpu_custom_call.1} parent=1 // pred_check_branch
      %13 = sbr.rel (0) target = $region5
    $region4: #{tpu_custom_call.1} parent=1 // pred_region
      _
    $region5: #{tpu_custom_call.1} parent=1 // pred_fallthru
      _
    // Predicated region
    $region6: #{tpu_custom_call.1} parent=1 // pred_check
      _
    $region7: #{tpu_custom_call.1} parent=1 // pred_check_branch
      %15 = sbr.rel (0) target = $region9
    $region8: #{tpu_custom_call.1} parent=1 // pred_region
      _
    $region9: #{tpu_custom_call.1} parent=1 // pred_fallthru
      _
    // Predicated region
    $region10: #{tpu_custom_call.1} parent=1 // pred_check
      _
    $region11: #{tpu_custom_call.1} parent=1 // pred_check_branch
      %17 = sbr.rel (0) target = $region13
    $region12: #{tpu_custom_call.1} parent=1 // pred_region
      _
    $region13: #{tpu_custom_call.1} parent=1 // pred_fallthru
      _
    // Predicated region
    $region14: #{tpu_custom_call.1} parent=1 // pred_check
      _
    $region15: #{tpu_custom_call.1} parent=1 // pred_check_branch
      %19 = sbr.rel (0) target = $region17
    $region16: #{tpu_custom_call.1} parent=1 // pred_region
      _
    $region17: #{tpu_custom_call.1} parent=1 // pred_fallthru
      _
    // Predicated region
    $region18: #{tpu_custom_call.1} parent=1 // pred_check
      _
    $region19: #{tpu_custom_call.1} parent=1 // pred_check_branch
      %21 = sbr.rel (0) target = $region21
    $region20: #{tpu_custom_call.1} parent=1 // pred_region
      _
    $region21: #{tpu_custom_call.1} parent=1 // pred_fallthru
      _
    // Predicated region
    $region22: #{tpu_custom_call.1} parent=1 // pred_check
      _
    $region23: #{tpu_custom_call.1} parent=1 // pred_check_branch
      %23 = sbr.rel (0) target = $region25
    $region24: #{tpu_custom_call.1} parent=1 // pred_region
      _
    $region25: #{tpu_custom_call.1} parent=1 // pred_fallthru
      _
    %v24 = vld [vmem:[%s0] sm:$0xff]
    %v25 = vld [vmem:[%s0 + $0x8] sm:$0xff]
    %v26 = vld [vmem:[%s1] sm:$0xff]
    %v27 = vld [vmem:[%s1 + $0x8] sm:$0xff]
    %v28 = vld [vmem:[%s1 + $0x10] sm:$0xff]
    %v29 = vld [vmem:[%s1 + $0x18] sm:$0xff]
    %v30 = vld [vmem:[%s1 + $0x20] sm:$0xff]
    %v31 = vld [vmem:[%s1 + $0x28] sm:$0xff]
    %v32 = vld [vmem:[%s1 + $0x30] sm:$0xff]
    %v33 = vld [vmem:[%s1 + $0x38] sm:$0xff]
    %v34 = vld [vmem:[%s1 + $0x40] sm:$0xff]
    %v35 = vld [vmem:[%s1 + $0x48] sm:$0xff]
    %v36 = vld [vmem:[%s1 + $0x50] sm:$0xff]
    %v37 = vld [vmem:[%s1 + $0x58] sm:$0xff]
    %v38 = vld [vmem:[%s1 + $0x60] sm:$0xff]
    %v39 = vld [vmem:[%s1 + $0x68] sm:$0xff]
    %v40 = vld [vmem:[%s1 + $0x70] sm:$0xff]
    %v41 = vld [vmem:[%s1 + $0x78] sm:$0xff]
    %v42 = vld [vmem:[%s2] sm:$0x1]
    %v44 = vlaneseq
    %v45 = vshrl.u32 %v44, 7
    %v46 = vsub.s32 0, %v45
    %v47 = vrot.slane %v42, %v46
    %49 = vmatprep.subr.mxu0 0.0
    %50 = vmatpush1.msra.mxu0 %v26
    %51 = vmatprep.subr.mxu0 0.0
    %52 = vmatpush1.msra.mxu0 %v27
    %53 = vmatprep.subr.mxu0 0.0
    %54 = vmatpush1.msra.mxu0 %v28
    %55 = vmatprep.subr.mxu0 0.0
    %56 = vmatpush1.msra.mxu0 %v29
    %57 = vmatprep.subr.mxu0 0.0
    %58 = vmatpush1.msra.mxu0 %v30
    %59 = vmatprep.subr.mxu0 0.0
    %60 = vmatpush1.msra.mxu0 %v31
    %61 = vmatprep.subr.mxu0 0.0
    %62 = vmatpush1.msra.mxu0 %v32
    %63 = vmatprep.subr.mxu0 0.0
    %64 = vmatpush1.msra.mxu0 %v33
    %65 = vmatprep.subr.mxu0 0.0
    %66 = vmatpush1.msra.mxu0 %v34
    %67 = vmatprep.subr.mxu0 0.0
    %68 = vmatpush1.msra.mxu0 %v35
    %69 = vmatprep.subr.mxu0 0.0
    %70 = vmatpush1.msra.mxu0 %v36
    %71 = vmatprep.subr.mxu0 0.0
    %72 = vmatpush1.msra.mxu0 %v37
    %73 = vmatprep.subr.mxu0 0.0
    %74 = vmatpush1.msra.mxu0 %v38
    %75 = vmatprep.subr.mxu0 0.0
    %76 = vmatpush1.msra.mxu0 %v39
    %77 = vmatprep.subr.mxu0 0.0
    %78 = vmatpush1.msra.mxu0 %v40
    %79 = vmatprep.subr.mxu0 0.0
    %80 = vmatpush1.msra.mxu0 %v41
    %81 = vmatprep.subr.mxu0 0.0
    %82 = vmatpush1.msra.mxu0 0.0
    %83 = vmatprep.subr.mxu0 0.0
    %84 = vmatpush1.msra.mxu0 0.0
    %85 = vmatprep.subr.mxu0 0.0
    %86 = vmatpush1.msra.mxu0 0.0
    %87 = vmatprep.subr.mxu0 0.0
    %88 = vmatpush1.msra.mxu0 0.0
    %89 = vmatprep.subr.mxu0 0.0
    %90 = vmatpush1.msra.mxu0 0.0
    %91 = vmatprep.subr.mxu0 0.0
    %92 = vmatpush1.msra.mxu0 0.0
    %93 = vmatprep.subr.mxu0 0.0
    %94 = vmatpush1.msra.mxu0 0.0
    %95 = vmatprep.subr.mxu0 0.0
    %96 = vmatpush1.msra.mxu0 0.0
    %97 = vmatprep.subr.mxu0 0.0
    %98 = vmatpush1.msra.mxu0 0.0
    %99 = vmatprep.subr.mxu0 0.0
    %100 = vmatpush1.msra.mxu0 0.0
    %101 = vmatprep.subr.mxu0 0.0
    %102 = vmatpush1.msra.mxu0 0.0
    %103 = vmatprep.subr.mxu0 0.0
    %104 = vmatpush1.msra.mxu0 0.0
    %105 = vmatprep.subr.mxu0 0.0
    %106 = vmatpush1.msra.mxu0 0.0
    %107 = vmatprep.subr.mxu0 0.0
    %108 = vmatpush1.msra.mxu0 0.0
    %109 = vmatprep.subr.mxu0 0.0
    %110 = vmatpush1.msra.mxu0 0.0
    %111 = vmatprep.subr.mxu0 0.0
    %112 = vmatpush1.msra.mxu0 0.0
    %113 = vmatprep.mubr.f32.mxu0 0.0
    %114 = vmatmul.mubr.f32.gmra.mrb[0].mxu0 %v24
    %v115 = vpop.f32.mrb[0].mxu0
    %v116 = vadd.f32 %v47, %v115
    %v117 = vpop.f32.mrb[0].mxu0
    %118 = vmatprep.mubr.f32.mxu0 0.0
    %119 = vmatmul.mubr.f32.gmra.mrb[0].mxu0 %v25
    %v120 = vpop.f32.mrb[0].mxu0
    %v121 = vadd.f32 %v47, %v120
    %v122 = vpop.f32.mrb[0].mxu0
    %123 = vdwg.mxu0
    %v124 = vld [vmem:[%s3] sm:$0xff]
    %v125 = vld [vmem:[%s3 + $0x8] sm:$0xff]
    %v126 = vadd.f32 %v116, %v124
    %v127 = vadd.f32 %v121, %v125
    %vm128 = vcmask 261120
    %v129 = vsel %vm128, %v126, 0.0
    %130 = vadd.xlane.f32.xlu0 %v129
    %v131 = vpop.xlane.xlu0 %130
    %v132 = vsel %vm128, %v127, 0.0
    %133 = vadd.xlane.f32.xlu0 %v132
    %v134 = vpop.xlane.xlu0 %133
    %v135 = vrcp.pop 32.0
    %v136 = vmul.f32 %v131, %v135
    %v137 = vmul.f32 %v134, %v135
    %v138 = vsub.f32 %v126, %v136
    %v139 = vsub.f32 %v127, %v137
    %v140 = vmul.f32 %v138, %v138
    %v141 = vmul.f32 %v139, %v139
    %v142 = vsel %vm128, %v140, 0.0
    %143 = vadd.xlane.f32.xlu0 %v142
    %v144 = vpop.xlane.xlu0 %143
    %v145 = vsel %vm128, %v141, 0.0
    %146 = vadd.xlane.f32.xlu0 %v145
    %v147 = vpop.xlane.xlu0 %146
    %v148 = vmul.f32 %v144, %v135
    %v149 = vmul.f32 %v147, %v135
    %v150 = vadd.f32 %v148, 1e-12
    %v151 = vadd.f32 %v149, 1e-12
    %v152 = vrsqrt.pop %v150
    %v153 = vrsqrt.pop %v151
    %v154 = vmul.f32 %v138, %v152
    %v155 = vmul.f32 %v139, %v153
    %v156 = vld [vmem:[%s4] sm:$0x1]
    %v158 = vlaneseq
    %v159 = vshrl.u32 %v158, 7
    %v160 = vsub.s32 0, %v159
    %v161 = vrot.slane %v156, %v160
    %v163 = vmul.f32 %v154, %v161
    %v164 = vmul.f32 %v155, %v161
    %v165 = vld [vmem:[%s5] sm:$0x1]
    %v167 = vlaneseq
    %v168 = vshrl.u32 %v167, 7
    %v169 = vsub.s32 0, %v168
    %v170 = vrot.slane %v165, %v169
    %v172 = vadd.f32 %v163, %v170
    %v173 = vadd.f32 %v164, %v170
    %174 = vst.msk [vmem:[#allocation2] sm:$0xff] %vm128, %v172
    %175 = vst.msk [vmem:[#allocation2 + $0x8] sm:$0xff] %vm128, %v173
    // Predicated region
    $region26: #{tpu_custom_call.1} parent=1 // pred_check
      _
    $region27: #{tpu_custom_call.1} parent=1 // pred_check_branch
      %177 = sbr.rel (0) target = $region29
    $region28: #{tpu_custom_call.1} parent=1 // pred_region
      %s179 = ssub.s32 256, 256
      %180 = vsyncadd [#allocation3], %s179
      %s181 = sshll.u32 [#allocation2], 4
      %s182 = int_to_ptr.vmem [resolvable:$true] %s181
      %187 = dma.vmem_to_hbm [thread:$0]  %s182, 256, %s6, [#allocation3], 128, 128, 8
    $region29: #{tpu_custom_call.1} parent=1 // pred_fallthru
      _
    // Predicated region
    $region30: #{tpu_custom_call.1} parent=1 // pred_check
      _
    $region31: #{tpu_custom_call.1} parent=1 // pred_check_branch
      %189 = sbr.rel (0) target = $region33
    $region32: #{tpu_custom_call.1} parent=1 // pred_region
      %190 = dma.done [#allocation3], 256
    $region33: #{tpu_custom_call.1} parent=1 // pred_fallthru
      _
    %191 = vsyncpa [#allocation3], 1

</llo_original>
